<compile_context>
chip_gen: v5e
topology: v5e:2x2
jax: 0.10.0
libtpu: 0.0.40
codegen_flags: <defaults>
</compile_context>

<pallas_src>
import functools

import jax
import jax.numpy as jnp
from jax import lax
from jax.experimental import pallas as pl
from jax.experimental.pallas import tpu as pltpu


def _sparsity_kernel(v_ref, c_ref, w_ref, eps_ref, o_ref):
    """Grid = (I // tm,).

    v_ref   : (1, H)  VMEM  - P_proj^T @ row_sparsities (constant block index ->
                              DMA'd once and kept resident)
    c_ref   : (1,)    SMEM  - proj_bias . row_sparsities (scalar)
    w_ref   : (tm, H) VMEM  - tile of weight_matrix rows
    eps_ref : (1, tm) VMEM  - uniform(0,1) noise, lane-dense row
    o_ref   : (1, tm) VMEM  - keep_probs output, lane-dense row
    """
    w = w_ref[...].astype(jnp.float32)
    # acc[0, r] = W[r] . v + c  == logit(alpha_r).  Contract on H for both
    # operands so the result is already a lane-dense (1, tm) row (no transpose).
    acc = lax.dot_general(
        v_ref[...], w,
        dimension_numbers=(((1,), (1,)), ((), ())),
        preferred_element_type=jnp.float32) + c_ref[0]

    # Clamp keeps log() finite for degenerate callers; no-op for eps well inside (0,1).
    eps = jnp.clip(eps_ref[...].astype(jnp.float32), 1e-7, 1.0 - 1e-7)
    noise = jnp.log(eps) - jnp.log(1.0 - eps)

    # log(alpha) - log(1 - alpha) == acc exactly -> skip sigmoid/log round trip.
    o_ref[...] = jax.nn.sigmoid(noise + acc).astype(o_ref.dtype)


def _pick_tm(intermediate_size, hidden_size):
    """Pick a row-tile size: big tiles (near roofline), >=2 grid steps when
    possible (v7x megacore), and a W tile capped at ~4 MiB f32 so double
    buffering stays far below scoped VMEM on every generation (incl. v7x)."""
    I, H = intermediate_size, hidden_size
    if I % 128 != 0:
        return I  # single block: block dims equal full array dims
    cap_rows = max(128, ((4 << 20) // (4 * max(H, 1))) // 128 * 128)
    tm = min(I, 2048, cap_rows)
    if I >= 256:
        tm = min(tm, I // 2)          # keep >= 2 grid steps for 2-TC chips
    tm = max(128, (tm // 128) * 128)
    while I % tm:
        tm -= 128
    return tm


@functools.partial(jax.jit, static_argnames=("tm",))
def sparsity_predictor_forward(weight_matrix, proj_w, proj_b, row_sparsities,
                               eps, *, tm=None):
    """weight_matrix: (I, H); proj_w: (I, H) [nn.Linear weight layout];
    proj_b: (I,); row_sparsities: (I, 1); eps: (I,) uniform(0,1) samples.
    Returns keep_probs: (I,) float32."""
    I, H = weight_matrix.shape

    # Rank-1 reductions (exact algebra), computed once; the (I, H) projection
    # weight never enters the kernel and is never transposed/copied in HBM.
    s = row_sparsities.reshape(I).astype(jnp.float32)
    v_row = (s @ proj_w.astype(jnp.float32)).reshape(1, H)   # P^T @ s
    c = jnp.dot(proj_b.astype(jnp.float32), s).reshape(1)    # b . s
    eps_row = eps.reshape(1, I).astype(jnp.float32)

    if tm is None:
        tm = _pick_tm(I, H)
    assert I % tm == 0

    out = pl.pallas_call(
        _sparsity_kernel,
        out_shape=jax.ShapeDtypeStruct((1, I), jnp.float32),
        grid_spec=pltpu.PrefetchScalarGridSpec(
            num_scalar_prefetch=0,
            grid=(I // tm,),
            in_specs=[
                pl.BlockSpec((1, H), lambda i: (0, 0)),            # v (resident)
                pl.BlockSpec(memory_space=pltpu.MemorySpace.SMEM),  # c scalar
                pl.BlockSpec((tm, H), lambda i: (i, 0)),           # W row tile
                pl.BlockSpec((1, tm), lambda i: (0, i)),           # eps row tile
            ],
            out_specs=pl.BlockSpec((1, tm), lambda i: (0, i)),     # lane-dense out
        ),
        compiler_params=pltpu.CompilerParams(
            dimension_semantics=("parallel",),
            vmem_limit_bytes=32 * 1024 * 1024),
    )(v_row, c, weight_matrix, eps_row)
    return out[0]


def _reference_forward(weight_matrix, proj_w, proj_b, row_sparsities, eps):
    proj_ = weight_matrix @ proj_w.T + proj_b
    alpha = jax.nn.sigmoid(proj_ @ row_sparsities)[:, 0]
    return jax.nn.sigmoid(jnp.log(eps) - jnp.log(1 - eps)
                          + jnp.log(alpha) - jnp.log(1 - alpha))


if __name__ == "__main__":
    hidden_size = 32
    intermediate_size = 256

    key = jax.random.PRNGKey(0)
    k_w, k_pw, k_pb, k_s, k_eps = jax.random.split(key, 5)

    # Deterministic synthetic "parameters" (not a checkpoint load).
    weight_matrix = jax.random.normal(
        k_w, (intermediate_size, hidden_size), jnp.float32) * 0.05
    bound = 1.0 / (hidden_size ** 0.5)
    proj_w = jax.random.uniform(
        k_pw, (intermediate_size, hidden_size), jnp.float32, -bound, bound)
    proj_b = jax.random.uniform(
        k_pb, (intermediate_size,), jnp.float32, -bound, bound)
    row_sparsities = jax.random.uniform(
        k_s, (intermediate_size, 1), jnp.float32)            # torch.rand(I, 1)
    # Uniform(0,1) noise for the reparameterization trick (drawn outside the
    # kernel so the kernel stays deterministic; the logit math is in-kernel).
    eps = jax.random.uniform(
        k_eps, (intermediate_size,), jnp.float32, 1e-6, 1.0 - 1e-6)

    keep_probs = sparsity_predictor_forward(
        weight_matrix, proj_w, proj_b, row_sparsities, eps)
    keep_probs = jax.block_until_ready(keep_probs)

    ref = _reference_forward(weight_matrix, proj_w, proj_b, row_sparsities, eps)
    assert keep_probs.shape == (intermediate_size,)
    assert jnp.allclose(keep_probs, ref, atol=2e-5, rtol=2e-5), "mismatch vs reference"

    print("KERNEL_OK")
</pallas_src>

<mosaic_0001>
module attributes {stable_mosaic.version = 11 : i64} {
  func.func @_sparsity_kernel(%arg0: i32, %arg1: memref<1x32xf32, #tpu.memory_space<vmem>>, %arg2: memref<1xf32, #tpu.memory_space<smem>>, %arg3: memref<128x32xf32, #tpu.memory_space<vmem>>, %arg4: memref<1x128xf32, #tpu.memory_space<vmem>>, %arg5: memref<1x128xf32, #tpu.memory_space<vmem>>) attributes {dimension_semantics = [#tpu.dimension_semantics<parallel>], iteration_bounds = array<i64: 2>, scalar_prefetch = 0 : i64, scratch_operands = 0 : i64, tpu.core_type = #tpu.core_type<tc>, window_params = [{pipeline_mode = #tpu.pipeline_mode<synchronous>, transform_indices = @transform_0, window_bounds = array<i64: 1, 32>}, {transform_indices = @transform_1, window_bounds = array<i64: 1>}, {transform_indices = @transform_2, window_bounds = array<i64: 128, 32>}, {transform_indices = @transform_3, window_bounds = array<i64: 1, 128>}, {transform_indices = @transform_4, window_bounds = array<i64: 1, 128>}]} {
    %c0 = arith.constant 0 : index
    %c0_0 = arith.constant 0 : index
    %0 = vector.load %arg3[%c0, %c0_0] : memref<128x32xf32, #tpu.memory_space<vmem>>, vector<128x32xf32>
    %c0_1 = arith.constant 0 : index
    %c0_2 = arith.constant 0 : index
    %1 = vector.load %arg1[%c0_1, %c0_2] : memref<1x32xf32, #tpu.memory_space<vmem>>, vector<1x32xf32>
    %cst = arith.constant dense<0.000000e+00> : vector<1x128xf32>
    %2 = tpu.matmul %1, %0, %cst {dimension_numbers = #tpu.dot_dimension_numbers<[1], [1], [0], [0], [0, 0, 1, 0], [], []>} : vector<1x32xf32>, vector<128x32xf32>, vector<1x128xf32> -> vector<1x128xf32>
    %c0_3 = arith.constant 0 : index
    %3 = memref.load %arg2[%c0_3] : memref<1xf32, #tpu.memory_space<smem>>
    %4 = vector.broadcast %3 : f32 to vector<1x128xf32>
    %5 = arith.addf %2, %4 : vector<1x128xf32>
    %c0_4 = arith.constant 0 : index
    %c0_5 = arith.constant 0 : index
    %6 = vector.load %arg4[%c0_4, %c0_5] : memref<1x128xf32, #tpu.memory_space<vmem>>, vector<1x128xf32>
    %cst_6 = arith.constant 1.000000e-07 : f32
    %cst_7 = arith.constant 0.99999988 : f32
    %7 = vector.broadcast %cst_6 : f32 to vector<1x128xf32>
    %8 = arith.maximumf %7, %6 : vector<1x128xf32>
    %9 = vector.broadcast %cst_7 : f32 to vector<1x128xf32>
    %10 = arith.minimumf %9, %8 : vector<1x128xf32>
    %11 = math.log %10 : vector<1x128xf32>
    %cst_8 = arith.constant 1.000000e+00 : f32
    %12 = vector.broadcast %cst_8 : f32 to vector<1x128xf32>
    %13 = arith.subf %12, %10 : vector<1x128xf32>
    %14 = math.log %13 : vector<1x128xf32>
    %15 = arith.subf %11, %14 : vector<1x128xf32>
    %16 = arith.addf %15, %5 : vector<1x128xf32>
    %17 = arith.negf %16 : vector<1x128xf32>
    %18 = math.exp %17 : vector<1x128xf32>
    %cst_9 = arith.constant 1.000000e+00 : f32
    %19 = vector.broadcast %cst_9 : f32 to vector<1x128xf32>
    %20 = arith.addf %19, %18 : vector<1x128xf32>
    %21 = arith.divf %19, %20 : vector<1x128xf32>
    %c0_10 = arith.constant 0 : index
    %c0_11 = arith.constant 0 : index
    %22 = vector.load %arg5[%c0_10, %c0_11] : memref<1x128xf32, #tpu.memory_space<vmem>>, vector<1x128xf32>
    tpu.vector_store %arg5[%c0_10, %c0_11], %21 {strides = array<i32>} : memref<1x128xf32, #tpu.memory_space<vmem>>, vector<1x128xf32>,
    return
  }
  func.func @transform_0(%arg0: i32) -> (i32, i32) {
    %c0_i32 = arith.constant 0 : i32
    %c0_i32_0 = arith.constant 0 : i32
    %c0_i32_1 = arith.constant 0 : i32
    return %c0_i32, %c0_i32_0 : i32, i32
  }
  func.func @transform_1(%arg0: i32) -> i32 {
    %c0_i32 = arith.constant 0 : i32
    %c0_i32_0 = arith.constant 0 : i32
    return %c0_i32 : i32
  }
  func.func @transform_2(%arg0: i32) -> (i32, i32) {
    %c0_i32 = arith.constant 0 : i32
    %c0_i32_0 = arith.constant 0 : i32
    return %arg0, %c0_i32 : i32, i32
  }
  func.func @transform_3(%arg0: i32) -> (i32, i32) {
    %c0_i32 = arith.constant 0 : i32
    %c0_i32_0 = arith.constant 0 : i32
    return %c0_i32, %arg0 : i32, i32
  }
  func.func @transform_4(%arg0: i32) -> (i32, i32) {
    %c0_i32 = arith.constant 0 : i32
    %c0_i32_0 = arith.constant 0 : i32
    return %c0_i32, %arg0 : i32, i32
  }
}

</mosaic_0001>

<llo_original>
// kernel: sparsity_predictor_forward.1
$region0: #{sparsity_predictor_forward.1}
  #allocation0 [shape = 'u32[]', space=smem, size = 0x4, offset = 0x4, fixed_abs, tag = 'smem constant byte address 0x4 - core index']
  #allocation1 [shape = 'u32[72,128]{1,0:T(1,128)}', space=vmem, size = 0x9000, scoped, tag = 'internal scratch']
  #allocation2 [shape = 'f32[1]{0:T(128)S(6)}', space=smem, size = 0x200, scoped, tag = 'scoped memory for sparsity_predictor_forward.1']
  %s0 = inlined_call_operand.vmem [shape: f32[1,32], index: 0, kind: input, shape index: {}]
  %s1 = inlined_call_operand.<no memory space> [shape: f32[1], index: 1, kind: input, shape index: {}]
  %s2 = inlined_call_operand.vmem [shape: f32[256,32], index: 2, kind: input, shape index: {}]
  %s3 = inlined_call_operand.vmem [shape: f32[1,256], index: 3, kind: input, shape index: {}]
  %s4 = inlined_call_operand.hbm [shape: f32[1,256], index: 4, kind: output, shape index: {}]
  %s5 = sld [smem:[#allocation0]]
  $region49: #{sparsity_predictor_forward.1} parent=0
    _
  %s7 = ssub.s32 1, %s5
  %s8 = scalar_select 0, %s7, %s5
  %9 = sst [smem:[#allocation2]] %s1
  $region1: #{sparsity_predictor_forward.1} parent=0
    #allocation3 [shape = 'u8[1024]{0}', space=vmem, size = 0x400, scoped, tag = 'output window, operand 0']
    #allocation4 [shape = 's32[2]{0}', space=sflag, size = 0x8, scoped, tag = 'scoped memory for sparsity_predictor_forward.1']
    %10 = vsyncpa [#allocation4], 0
    %s11 = scalar_lea.sflag [#allocation4], 1
    %12 = vsyncpa %s11, 0
    loop: start=0, step=1, limit=4
    $region2: #{sparsity_predictor_forward.1} parent=1 // loop_pre_header
      _
    $region3: #{sparsity_predictor_forward.1} parent=1 // loop_header
      %s14 = sphi 0, %s18
      %p15 = scmp.ge.s32.totalorder %s14, 4
      %s22 = sphi 0, %s22
      %s24 = sphi 0, %s22
      %s25 = sphi 0, %s24
      %s39 = sphi 0, %s25
      %s43 = sphi 0, %s43
      %s45 = sphi 0, %s43
      %s46 = sphi 0, %s45
      %s60 = sphi 0, %s46
      %s66 = sphi 0, %s68
      %s69 = sphi 0, %s66
      %s70 = sphi 0, %s69
      %s86 = sphi 0, %s70
      %s92 = sphi 0, %s94
      %s95 = sphi 0, %s92
      %s96 = sphi 0, %s95
      %s112 = sphi 0, %s96
      %s118 = sphi 0, %s120
      %s121 = sphi 0, %s118
      %s122 = sphi 0, %s121
      %s138 = sphi 0, %s122
    $region4: #{sparsity_predictor_forward.1} parent=1 // loop_header_branch
      %17 = sbr.rel (%p15) target = $region8
    $region5: #{sparsity_predictor_forward.1} parent=1 // loop_body
      %s19 = ssub.s32 %s14, 1
      %s20 = ssub.s32 %s14, 2
      %s21 = sadd.s32 %s14, 1
      %s23 = sadd.s32 %s22, 1
      %p26 = scmp.eq.s32.totalorder %s14, 1
      %p27 = scmp.ne.s32.totalorder %s22, %s24
      %p28 = scmp.eq.s32.totalorder %s14, 0
      %p29 = por %p27, %p28
      %p30 = scmp.ne.s32.totalorder %s22, %s24
      %p31 = scmp.eq.s32.totalorder %s19, 1
      %p32 = por %p30, %p31
      %p33 = scmp.ne.s32.totalorder %s24, %s25
      %p34 = scmp.eq.s32.totalorder %s19, 0
      %p35 = por %p33, %p34
      %p36 = scmp.ne.s32.totalorder %s24, %s25
      %p37 = scmp.eq.s32.totalorder %s20, 1
      %p38 = por %p36, %p37
      %p40 = scmp.ne.s32.totalorder %s25, %s39
      %p41 = scmp.eq.s32.totalorder %s20, 0
      %p42 = por %p40, %p41
      %s44 = sadd.s32 %s43, 1
      %p47 = scmp.eq.s32.totalorder %s14, 1
      %p48 = scmp.ne.s32.totalorder %s43, %s45
      %p49 = scmp.eq.s32.totalorder %s14, 0
      %p50 = por %p48, %p49
      %p51 = scmp.ne.s32.totalorder %s43, %s45
      %p52 = scmp.eq.s32.totalorder %s19, 1
      %p53 = por %p51, %p52
      %p54 = scmp.ne.s32.totalorder %s45, %s46
      %p55 = scmp.eq.s32.totalorder %s19, 0
      %p56 = por %p54, %p55
      %p57 = scmp.ne.s32.totalorder %s45, %s46
      %p58 = scmp.eq.s32.totalorder %s20, 1
      %p59 = por %p57, %p58
      %p61 = scmp.ne.s32.totalorder %s46, %s60
      %p62 = scmp.eq.s32.totalorder %s20, 0
      %p63 = por %p61, %p62
      %s64 = ssub.s32 %s14, %s21
      %p65 = scmp.eq.s32.totalorder %s64, 0
      %s67 = sadd.s32 %s66, 1
      %s68 = scalar_select %p65, %s66, %s67
      %p71 = pneg %p65
      %p72 = scmp.eq.s32.totalorder %s14, 1
      %p73 = por %p71, %p72
      %p74 = scmp.ne.s32.totalorder %s66, %s69
      %p75 = scmp.eq.s32.totalorder %s14, 0
      %p76 = por %p74, %p75
      %p77 = scmp.ne.s32.totalorder %s66, %s69
      %p78 = scmp.eq.s32.totalorder %s19, 1
      %p79 = por %p77, %p78
      %p80 = scmp.ne.s32.totalorder %s69, %s70
      %p81 = scmp.eq.s32.totalorder %s19, 0
      %p82 = por %p80, %p81
      %p83 = scmp.ne.s32.totalorder %s69, %s70
      %p84 = scmp.eq.s32.totalorder %s20, 1
      %p85 = por %p83, %p84
      %p87 = scmp.ne.s32.totalorder %s70, %s86
      %p88 = scmp.eq.s32.totalorder %s20, 0
      %p89 = por %p87, %p88
      %s90 = ssub.s32 %s14, %s21
      %p91 = scmp.eq.s32.totalorder %s90, 0
      %s93 = sadd.s32 %s92, 1
      %s94 = scalar_select %p91, %s92, %s93
      %p97 = pneg %p91
      %p98 = scmp.eq.s32.totalorder %s14, 1
      %p99 = por %p97, %p98
      %p100 = scmp.ne.s32.totalorder %s92, %s95
      %p101 = scmp.eq.s32.totalorder %s14, 0
      %p102 = por %p100, %p101
      %p103 = scmp.ne.s32.totalorder %s92, %s95
      %p104 = scmp.eq.s32.totalorder %s19, 1
      %p105 = por %p103, %p104
      %p106 = scmp.ne.s32.totalorder %s95, %s96
      %p107 = scmp.eq.s32.totalorder %s19, 0
      %p108 = por %p106, %p107
      %p109 = scmp.ne.s32.totalorder %s95, %s96
      %p110 = scmp.eq.s32.totalorder %s20, 1
      %p111 = por %p109, %p110
      %p113 = scmp.ne.s32.totalorder %s96, %s112
      %p114 = scmp.eq.s32.totalorder %s20, 0
      %p115 = por %p113, %p114
      %s116 = ssub.s32 %s14, %s21
      %p117 = scmp.eq.s32.totalorder %s116, 0
      %s119 = sadd.s32 %s118, 1
      %s120 = scalar_select %p117, %s118, %s119
      %p123 = pneg %p117
      %p124 = scmp.eq.s32.totalorder %s14, 1
      %p125 = por %p123, %p124
      %p126 = scmp.ne.s32.totalorder %s118, %s121
      %p127 = scmp.eq.s32.totalorder %s14, 0
      %p128 = por %p126, %p127
      %p129 = scmp.ne.s32.totalorder %s118, %s121
      %p130 = scmp.eq.s32.totalorder %s19, 1
      %p131 = por %p129, %p130
      %p132 = scmp.ne.s32.totalorder %s121, %s122
      %p133 = scmp.eq.s32.totalorder %s19, 0
      %p134 = por %p132, %p133
      %p135 = scmp.ne.s32.totalorder %s121, %s122
      %p136 = scmp.eq.s32.totalorder %s20, 1
      %p137 = por %p135, %p136
      %p139 = scmp.ne.s32.totalorder %s122, %s138
      %p140 = scmp.eq.s32.totalorder %s20, 0
      %p141 = por %p139, %p140
      %p142 = scmp.le.s32.totalorder 1, %s14
      %p143 = scmp.lt.s32.totalorder %s14, 3
      %p144 = pnand %p142, %p143
      %p145 = pneg %p144
      // Predicated region
      $region9: #{sparsity_predictor_forward.1} parent=5 // pred_check
        _
      $region10: #{sparsity_predictor_forward.1} parent=5 // pred_check_branch
        %147 = sbr.rel (%p144) target = $region12
      $region11: #{sparsity_predictor_forward.1} parent=5 // pred_region
        %s148 = ssub.s32 %s14, 1
        // Predicated region
        $region13: #{sparsity_predictor_forward.1} parent=11 // pred_check
          %p149 = pneg %p35
        $region14: #{sparsity_predictor_forward.1} parent=11 // pred_check_branch
          %151 = sbr.rel (%p149) target = $region16
        $region15: #{sparsity_predictor_forward.1} parent=11 // pred_region
          _
        $region16: #{sparsity_predictor_forward.1} parent=11 // pred_fallthru
          _
        // Predicated region
        $region17: #{sparsity_predictor_forward.1} parent=11 // pred_check
          %p152 = pneg %p56
        $region18: #{sparsity_predictor_forward.1} parent=11 // pred_check_branch
          %154 = sbr.rel (%p152) target = $region20
        $region19: #{sparsity_predictor_forward.1} parent=11 // pred_region
          _
        $region20: #{sparsity_predictor_forward.1} parent=11 // pred_fallthru
          _
      $region12: #{sparsity_predictor_forward.1} parent=5 // pred_fallthru
        _
      %p155 = scmp.lt.s32.totalorder %s14, 2
      // Predicated region
      $region21: #{sparsity_predictor_forward.1} parent=5 // pred_check
        %p156 = pneg %p155
      $region22: #{sparsity_predictor_forward.1} parent=5 // pred_check_branch
        %158 = sbr.rel (%p156) target = $region24
      $region23: #{sparsity_predictor_forward.1} parent=5 // pred_region
        // Predicated region
        $region25: #{sparsity_predictor_forward.1} parent=23 // pred_check
          %p159 = pneg %p76
        $region26: #{sparsity_predictor_forward.1} parent=23 // pred_check_branch
          %161 = sbr.rel (%p159) target = $region28
        $region27: #{sparsity_predictor_forward.1} parent=23 // pred_region
          %s162 = smul.u32 16, %s14
          %p163 = scmp.lt.s32.totalorder %s162, 31
          %s164 = scalar_select %p163, %s162, 31
          %s165 = smul.addr %s164, 8
          %s166 = scalar_lea.vmem %s2, %s165
          %s167 = smul.u32 16, %s14
        $region28: #{sparsity_predictor_forward.1} parent=23 // pred_fallthru
          _
        // Predicated region
        $region29: #{sparsity_predictor_forward.1} parent=23 // pred_check
          %p168 = pneg %p102
        $region30: #{sparsity_predictor_forward.1} parent=23 // pred_check_branch
          %170 = sbr.rel (%p168) target = $region32
        $region31: #{sparsity_predictor_forward.1} parent=23 // pred_region
          %p171 = scmp.lt.s32.totalorder %s14, 1
          %s172 = scalar_select %p171, %s14, 1
          %s173 = scalar_lea.vmem %s3, %s172
        $region32: #{sparsity_predictor_forward.1} parent=23 // pred_fallthru
          _
      $region24: #{sparsity_predictor_forward.1} parent=5 // pred_fallthru
        _
      %p174 = scmp.le.s32.totalorder 1, %s14
      %p175 = scmp.lt.s32.totalorder %s14, 3
      %p176 = pnand %p174, %p175
      %p177 = pneg %p176
      // Predicated region
      $region33: #{sparsity_predictor_forward.1} parent=5 // pred_check
        _
      $region34: #{sparsity_predictor_forward.1} parent=5 // pred_check_branch
        %179 = sbr.rel (%p176) target = $region36
      $region35: #{sparsity_predictor_forward.1} parent=5 // pred_region
        %s180 = ssub.s32 %s14, 1
        %p181 = pneg %p35
        %p182 = pneg %p32
        %p183 = pneg %p56
        %p184 = pneg %p53
        %s185 = smul.u32 16, %s19
        %p186 = scmp.lt.s32.totalorder %s185, 31
        %s187 = scalar_select %p186, %s185, 31
        %s188 = smul.addr %s187, 8
        %s189 = scalar_lea.vmem %s2, %s188
        %p190 = pneg %p82
        %p191 = pneg %p79
        %p192 = scmp.lt.s32.totalorder %s19, 1
        %s193 = scalar_select %p192, %s19, 1
        %s194 = scalar_lea.vmem %s3, %s193
        %p195 = pneg %p108
        %p196 = pneg %p105
        %p197 = pneg %p134
        %p198 = pneg %p131
        %s199 = sand.u32 %s121, 1
        %s200 = scalar_lea.sflag [#allocation4], %s199
        %s201 = sand.u32 %s121, 1
        %s202 = scalar_lea.vmem [#allocation3], %s201
        %s203 = smul.u32 16, %s19
        %p204 = scmp.lt.s32.totalorder %s203, 31
        %s205 = scalar_select %p204, %s203, 31
        %s206 = smul.addr %s205, 8
        %s207 = scalar_lea.vmem %s2, %s206
        %s208 = smul.u32 16, %s19
        %p209 = scmp.lt.s32.totalorder %s19, 1
        %s210 = scalar_select %p209, %s19, 1
        %s211 = scalar_lea.vmem %s3, %s210
        %v212 = vld [vmem:[%s207] sm:$0xff]
        %v213 = vld [vmem:[%s207 + $0x8] sm:$0xff]
        %v214 = vld [vmem:[%s207 + $0x10] sm:$0xff]
        %v215 = vld [vmem:[%s207 + $0x18] sm:$0xff]
        %v216 = vld [vmem:[%s207 + $0x20] sm:$0xff]
        %v217 = vld [vmem:[%s207 + $0x28] sm:$0xff]
        %v218 = vld [vmem:[%s207 + $0x30] sm:$0xff]
        %v219 = vld [vmem:[%s207 + $0x38] sm:$0xff]
        %v220 = vld [vmem:[%s207 + $0x40] sm:$0xff]
        %v221 = vld [vmem:[%s207 + $0x48] sm:$0xff]
        %v222 = vld [vmem:[%s207 + $0x50] sm:$0xff]
        %v223 = vld [vmem:[%s207 + $0x58] sm:$0xff]
        %v224 = vld [vmem:[%s207 + $0x60] sm:$0xff]
        %v225 = vld [vmem:[%s207 + $0x68] sm:$0xff]
        %v226 = vld [vmem:[%s207 + $0x70] sm:$0xff]
        %v227 = vld [vmem:[%s207 + $0x78] sm:$0xff]
        %v228 = vld [vmem:[%s0] sm:$0x1]
        %s229 = sld [smem:[#allocation2]]
        %v230 = vstv %s229
        %vm231 = vcmask 261120
        %v233 = vsel %vm231, %v228, 0
        %v236 = vsel %vm231, %v212, 0
        %v239 = vsel %vm231, %v213, 0
        %v242 = vsel %vm231, %v214, 0
        %v245 = vsel %vm231, %v215, 0
        %v248 = vsel %vm231, %v216, 0
        %v251 = vsel %vm231, %v217, 0
        %v254 = vsel %vm231, %v218, 0
        %v257 = vsel %vm231, %v219, 0
        %v260 = vsel %vm231, %v220, 0
        %v263 = vsel %vm231, %v221, 0
        %v266 = vsel %vm231, %v222, 0
        %v269 = vsel %vm231, %v223, 0
        %v272 = vsel %vm231, %v224, 0
        %v275 = vsel %vm231, %v225, 0
        %v278 = vsel %vm231, %v226, 0
        %v281 = vsel %vm231, %v227, 0
        %283 = vmatpush.xpose.msra.mxu0 %v281
        %284 = vmatpush.xpose.msra.mxu0 %v278
        %285 = vmatpush.xpose.msra.mxu0 %v275
        %286 = vmatpush.xpose.msra.mxu0 %v272
        %287 = vmatpush.xpose.msra.mxu0 %v269
        %288 = vmatpush.xpose.msra.mxu0 %v266
        %289 = vmatpush.xpose.msra.mxu0 %v263
        %290 = vmatpush.xpose.msra.mxu0 %v260
        %291 = vmatpush.xpose.msra.mxu0 %v257
        %292 = vmatpush.xpose.msra.mxu0 %v254
        %293 = vmatpush.xpose.msra.mxu0 %v251
        %294 = vmatpush.xpose.msra.mxu0 %v248
        %295 = vmatpush.xpose.msra.mxu0 %v245
        %296 = vmatpush.xpose.msra.mxu0 %v242
        %297 = vmatpush.xpose.msra.mxu0 %v239
        %298 = vmatpush.xpose.msra.mxu0 %v236
        %299 = vmatmul.f32.gmra.mxu0 %v233
        %v300 = vpop.f32.mrf.mxu0
        %v301 = vadd.f32 %v230, %v300
        %302 = vdwg.mxu0
        %v303 = vld [vmem:[%s211] sm:$0x1]
        %v304 = vmax.f32 %v303, 1e-07
        %v305 = vmin.f32 %v304, 0.9999999
        %v306 = vlog2.pop %v305
        %v307 = vmul.f32 %v306, 0.6931472
        %v308 = vsub.f32 1.0, %v305
        %v309 = vlog2.pop %v308
        %v310 = vmul.f32 %v309, 0.6931472
        %v311 = vsub.f32 %v307, %v310
        %v312 = vadd.f32 %v311, %v301
        %v313 = vxor.u32 %v312, 2147483648
        %v314 = vmul.f32 %v313, 1.442695
        %v315 = vpow.pop %v314
        %v316 = vadd.f32 %v315, 1.0
        %v317 = vrcp.pop %v316
        %v318 = vmul.f32 %v316, %v317
        %v319 = vsub.f32 1.0, %v318
        %v320 = vmul.f32 %v317, %v319
        %v321 = vadd.f32 %v317, %v320
        %vm322 = vweird.f32 %v316
        %vm323 = vweird.f32 %v317
        %vm324 = vmor %vm322, %vm323
        %v325 = vsel %vm324, %v317, %v321
        %v326 = vand.u32 2147483647, %v316
        %vm327 = vcmp.eq.f32.partialorder %v326, 8.507059e+37
        %v328 = vand.u32 %v316, 2147483648
        %v329 = vor.u32 1.1754944e-38, %v328
        %v330 = vsel %vm327, %v329, %v325
        %v331 = vmul.f32 1.0, %v330
        %332 = vst [vmem:[%s202] sm:$0x1] %v331
        %s333 = sand.u32 %s121, 1
        %s334 = scalar_lea.sflag [#allocation4], %s333
        %s335 = sand.u32 %s121, 1
        %s336 = scalar_lea.vmem [#allocation3], %s335
        // Predicated region
        $region37: #{sparsity_predictor_forward.1} parent=35 // pred_check
          %p337 = pneg %p131
        $region38: #{sparsity_predictor_forward.1} parent=35 // pred_check_branch
          %339 = sbr.rel (%p337) target = $region40
        $region39: #{sparsity_predictor_forward.1} parent=35 // pred_region
          %341 = vsyncadd %s334, 0
          %s342 = scalar_lea.hbm %s4, %s19
          %s344 = sshll.u32 %s336, 4
          %s345 = int_to_ptr.vmem [resolvable:$true] %s344
          %s346 = sshll.u32 %s342, 4
          %s347 = int_to_ptr.hbm [resolvable:$true] %s346
          %349 = dma.vmem_to_hbm [thread:$0]  %s345, 16, %s347, %s334
        $region40: #{sparsity_predictor_forward.1} parent=35 // pred_fallthru
          _
      $region36: #{sparsity_predictor_forward.1} parent=5 // pred_fallthru
        _
      %p350 = scmp.le.s32.totalorder 2, %s14
      // Predicated region
      $region41: #{sparsity_predictor_forward.1} parent=5 // pred_check
        %p351 = pneg %p350
      $region42: #{sparsity_predictor_forward.1} parent=5 // pred_check_branch
        %353 = sbr.rel (%p351) target = $region44
      $region43: #{sparsity_predictor_forward.1} parent=5 // pred_region
        %s354 = ssub.s32 %s14, 2
        // Predicated region
        $region45: #{sparsity_predictor_forward.1} parent=43 // pred_check
          %p355 = pneg %p137
        $region46: #{sparsity_predictor_forward.1} parent=43 // pred_check_branch
          %357 = sbr.rel (%p355) target = $region48
        $region47: #{sparsity_predictor_forward.1} parent=43 // pred_region
          %s358 = sand.u32 %s122, 1
          %s359 = scalar_lea.sflag [#allocation4], %s358
          %s360 = sand.u32 %s122, 1
          %s361 = scalar_lea.vmem [#allocation3], %s360
          %363 = dma.done %s359, 16
        $region48: #{sparsity_predictor_forward.1} parent=43 // pred_fallthru
          _
      $region44: #{sparsity_predictor_forward.1} parent=5 // pred_fallthru
        _
    $region6: #{sparsity_predictor_forward.1} parent=1 // loop_footer
      %s18 = sadd.s32 1, %s14
    $region7: #{sparsity_predictor_forward.1} parent=1 // loop_footer_branch
      %13 = sbr.rel target = $region3
    $region8: #{sparsity_predictor_forward.1} parent=1 // loop_exit
      _
    %364 = vsyncpa [#allocation4], 1
    %s365 = scalar_lea.sflag [#allocation4], 1
    %366 = vsyncpa %s365, 1

</llo_original>
